<compile_context>
chip_gen: v7x
topology: tpu7x:2x2x1
jax: 0.10.0
libtpu: 0.0.40
codegen_flags: <defaults>
</compile_context>

<pallas_src>
import functools

import numpy as np
import jax
import jax.numpy as jnp
from jax.experimental import pallas as pl
from jax.experimental.pallas import tpu as pltpu


WEIGHT_DTYPE = jnp.float32  # set to jnp.bfloat16 on v5e/v6e to halve weight DMA


# ---------------------------------------------------------------------------
# Fused forward kernel (whole network, single invocation, everything in VMEM)
# refs = (x, place, w1, w2, pre_w, placer_w0..placer_w{L-1}, head_w, bias, out)
# bias row layout: 0=conv1, 1=conv2, 2=prePredictionHead, 3..3+L-1=placer,
#                  3+L = fused head bias (policy | value).
# ---------------------------------------------------------------------------
def _fused_forward_kernel(*refs, num_layers, dims):
    x_ref, place_ref, w1_ref, w2_ref, pre_w_ref = refs[:5]
    placer_w_refs = refs[5:5 + num_layers]
    head_w_ref, bias_ref, out_ref = refs[5 + num_layers:5 + num_layers + 3]

    def dense(x, w_ref, bias_row, n, relu=True):
        y = jnp.dot(x, w_ref[...].astype(jnp.float32),
                    preferred_element_type=jnp.float32)
        y = y + bias_ref[bias_row:bias_row + 1, :n]
        return jnp.maximum(y, 0.0) if relu else y

    # --- map path: conv1 & conv2 expressed as dense matmuls on flat NHWC ---
    h1 = dense(x_ref[...], w1_ref, 0, dims["n1"])        # conv1 + ReLU
    h2 = dense(h1, w2_ref, 1, dims["n2"])                 # conv2 + ReLU (flat)
    map_feat = dense(h2, pre_w_ref, 2, dims["n_pre"])     # prePredictionHead

    # --- place path: PlaceProcessor MLP ---
    h = place_ref[...]
    for li in range(num_layers):
        h = dense(h, placer_w_refs[li], 3 + li, dims["hidden"])

    # --- fused heads: cols [0:no] = policy, col [no] = value ---
    feat = jnp.concatenate([map_feat, h], axis=-1)        # (B, n_pre+hidden)
    out_ref[...] = dense(feat, head_w_ref, 3 + num_layers, dims["n_head"],
                         relu=False)


# ---------------------------------------------------------------------------
# One-time parameter preparation (fold convs, fuse heads, pack biases)
# ---------------------------------------------------------------------------
def _expand_conv(w_k, b, c_in, c_out, in_h, in_w, kh, kw, stride, pad):
    """Fold a (kh,kw,stride,pad) conv into an equivalent dense matmul acting
    on the row-major flattened NHWC input: (in_h*in_w*c_in, oh*ow*c_out)."""
    w_np = np.asarray(w_k, np.float32)       # rows: (ky*kw+kx)*c_in + ci
    oh = (in_h + 2 * pad - kh) // stride + 1
    ow = (in_w + 2 * pad - kw) // stride + 1
    W = np.zeros((in_h * in_w * c_in, oh * ow * c_out), np.float32)
    for oy in range(oh):
        for ox in range(ow):
            col0 = (oy * ow + ox) * c_out
            for ky in range(kh):
                for kx in range(kw):
                    iy = oy * stride + ky - pad
                    ix = ox * stride + kx - pad
                    if 0 <= iy < in_h and 0 <= ix < in_w:
                        row0 = (iy * in_w + ix) * c_in
                        blk = w_np[(ky * kw + kx) * c_in:
                                   (ky * kw + kx + 1) * c_in, :]
                        W[row0:row0 + c_in, col0:col0 + c_out] = blk
    b_exp = np.tile(np.asarray(b, np.float32), oh * ow)
    return W, b_exp, oh, ow


def prepare_params(params, *, hidden, maze, num_layers, num_outputs,
                   weight_dtype=WEIGHT_DTYPE):
    assert num_layers >= 1
    w1, b1, oh1, ow1 = _expand_conv(params["conv1_w"], params["conv1_b"],
                                    3, hidden, maze, maze, 3, 3, 2, 1)
    w2, b2, _, _ = _expand_conv(params["conv2_w"], params["conv2_b"],
                                hidden, 2 * hidden, oh1, ow1, 3, 3, 2, 0)
    pre_w = np.asarray(params["pre_w"], np.float32)
    pre_b = np.asarray(params["pre_b"], np.float32)
    n1, n2, n_pre = w1.shape[1], w2.shape[1], pre_w.shape[1]
    n_head = num_outputs + 1

    # Guard: conv-as-dense scales as (H*W*Cin)x(OH*OW*Cout); keep it well
    # inside v7x's 64 MiB physical / 32 MiB scoped VMEM.
    # TODO(synk): tile conv1 over a grid axis (or revert to in-kernel im2col)
    #             once mazeSize grows past ~32.
    assert w1.nbytes + w2.nbytes + pre_w.nbytes < 16 * 1024 * 1024, \
        "conv-as-dense fold too large for single-step VMEM residency; tile it"

    # Fused heads: rows [0:n_pre] = map branch, rows [n_pre:] = place branch;
    # cols [0:num_outputs] = policy, col [num_outputs] = value; biases summed.
    wm = np.concatenate([np.asarray(params["pol_w"], np.float32),
                         np.asarray(params["val_w"], np.float32)], axis=1)
    wp = np.concatenate([np.asarray(params["ppol_w"], np.float32),
                         np.asarray(params["pval_w"], np.float32)], axis=1)
    head_w = np.concatenate([wm, wp], axis=0)              # (n_pre+hidden, n_head)
    head_b = np.concatenate(
        [np.asarray(params["pol_b"], np.float32)
         + np.asarray(params["ppol_b"], np.float32),
         np.asarray(params["val_b"], np.float32)
         + np.asarray(params["pval_b"], np.float32)])

    # All biases packed into ONE (rows, width) buffer -> a single input DMA.
    bias_rows = [b1, b2, pre_b] + \
                [np.asarray(b, np.float32) for (_, b) in params["placer"]] + \
                [head_b]
    width = max(r.shape[0] for r in bias_rows)
    bias = np.zeros((len(bias_rows), width), np.float32)
    for i, r in enumerate(bias_rows):
        bias[i, :r.shape[0]] = r

    weights = [jnp.asarray(w1, weight_dtype),
               jnp.asarray(w2, weight_dtype),
               jnp.asarray(pre_w, weight_dtype)]
    for (w, _) in params["placer"]:
        weights.append(jnp.asarray(np.asarray(w, np.float32), weight_dtype))
    weights.append(jnp.asarray(head_w, weight_dtype))
    weights.append(jnp.asarray(bias, jnp.float32))  # biases stay f32

    meta = dict(num_layers=num_layers, num_outputs=num_outputs,
                dims=dict(n1=n1, n2=n2, n_pre=n_pre, hidden=hidden,
                          n_head=n_head))
    return tuple(weights), meta


# ---------------------------------------------------------------------------
# Forward wrapper: one pallas_call, no grid, no host-side padding
# ---------------------------------------------------------------------------
def place_maze_net_forward(map_obs, place_obs, weights, *, meta):
    B = map_obs.shape[0]
    x = map_obs.astype(jnp.float32).reshape(B, -1)      # (B, H*W*3), row-major
    place = place_obs.astype(jnp.float32)               # (B, place_dim)

    inputs = (x, place) + tuple(weights)
    vmem = pltpu.MemorySpace.VMEM

    out = pl.pallas_call(
        functools.partial(_fused_forward_kernel,
                          num_layers=meta["num_layers"], dims=meta["dims"]),
        out_shape=jax.ShapeDtypeStruct((B, meta["dims"]["n_head"]),
                                       jnp.float32),
        in_specs=[pl.BlockSpec(memory_space=vmem) for _ in inputs],
        out_specs=pl.BlockSpec(memory_space=vmem),
    )(*inputs)

    no = meta["num_outputs"]
    return out[:, :no], out[:, no]


# ---------------------------------------------------------------------------
# Raw parameter construction (deterministic, synthetic)
# ---------------------------------------------------------------------------
def init_params(key, hidden, maze, place_dim, num_layers, num_outputs):
    def dense(k, fan_in, fan_out):
        kw_, kb_ = jax.random.split(k)
        s = 1.0 / jnp.sqrt(fan_in)
        return (jax.random.uniform(kw_, (fan_in, fan_out), jnp.float32, -s, s),
                jax.random.uniform(kb_, (fan_out,), jnp.float32, -s, s))

    keys = jax.random.split(key, 16)
    p = {}
    conv_out = (maze // 2 + 1) // 2
    lin_hidden = hidden * 8

    p["conv1_w"], p["conv1_b"] = dense(keys[0], 3 * 3 * 3, hidden)
    p["conv2_w"], p["conv2_b"] = dense(keys[1], 3 * 3 * hidden, 2 * hidden)
    p["pre_w"], p["pre_b"] = dense(keys[2], conv_out ** 2 * hidden * 2, lin_hidden)
    p["pol_w"], p["pol_b"] = dense(keys[3], lin_hidden, num_outputs)
    p["val_w"], p["val_b"] = dense(keys[4], lin_hidden, 1)
    p["placer"] = []
    in_dim = place_dim
    for li in range(num_layers):
        w, b = dense(keys[5 + li], in_dim, hidden)
        p["placer"].append((w, b))
        in_dim = hidden
    p["ppol_w"], p["ppol_b"] = dense(keys[12], hidden, num_outputs)
    p["pval_w"], p["pval_b"] = dense(keys[13], hidden, 1)
    return p


# ---------------------------------------------------------------------------
# Pure-JAX reference (im2col convs + dense layers) for correctness checking
# ---------------------------------------------------------------------------
def _im2col(x_nhwc, kh, kw, stride, pad):
    x = jnp.pad(x_nhwc, ((0, 0), (pad, pad), (pad, pad), (0, 0)))
    B, H, W, C = x.shape
    oh = (H - kh) // stride + 1
    ow = (W - kw) // stride + 1
    cols = []
    for i in range(kh):
        for j in range(kw):
            cols.append(x[:, i:i + stride * oh:stride, j:j + stride * ow:stride, :])
    patches = jnp.concatenate(cols, axis=-1)
    return patches.reshape(B * oh * ow, kh * kw * C), oh, ow


def reference_forward(map_obs, place_obs, params, *, hidden):
    hi = jax.lax.Precision.HIGHEST
    B = map_obs.shape[0]
    x = map_obs.astype(jnp.float32)
    place = place_obs.astype(jnp.float32)

    patches, oh, ow = _im2col(x, 3, 3, 2, 1)
    h1 = jax.nn.relu(jnp.dot(patches, params["conv1_w"], precision=hi)
                     + params["conv1_b"]).reshape(B, oh, ow, hidden)
    patches2, oh2, ow2 = _im2col(h1, 3, 3, 2, 0)
    h2 = jax.nn.relu(jnp.dot(patches2, params["conv2_w"], precision=hi)
                     + params["conv2_b"]).reshape(B, oh2 * ow2 * 2 * hidden)
    map_feat = jax.nn.relu(jnp.dot(h2, params["pre_w"], precision=hi)
                           + params["pre_b"])

    h = place
    for (w, b) in params["placer"]:
        h = jax.nn.relu(jnp.dot(h, w, precision=hi) + b)

    policy = (jnp.dot(map_feat, params["pol_w"], precision=hi) + params["pol_b"]
              + jnp.dot(h, params["ppol_w"], precision=hi) + params["ppol_b"])
    value = (jnp.dot(map_feat, params["val_w"], precision=hi) + params["val_b"]
             + jnp.dot(h, params["pval_w"], precision=hi) + params["pval_b"])[:, 0]
    return policy, value


if __name__ == "__main__":
    BATCH = 2
    HIDDEN = 16        # hiddenSize
    NUM_LAYERS = 2     # numLayers
    MAZE = 9           # mazeSize -> conv output spatial (9//2+1)//2 = 2
    NUM_OUTPUTS = 5
    PLACE_DIM = 12     # obs_space.shape[0] - mazeSize**2 * 3

    key = jax.random.PRNGKey(0)
    k_map, k_place, k_params = jax.random.split(key, 3)

    map_obs = jax.random.normal(k_map, (BATCH, MAZE, MAZE, 3), jnp.float32)
    place_obs = jax.random.normal(k_place, (BATCH, PLACE_DIM), jnp.float32)
    params = init_params(k_params, HIDDEN, MAZE, PLACE_DIM,
                         NUM_LAYERS, NUM_OUTPUTS)

    # one-time prepare (fold convs to dense, fuse heads, pack biases)
    weights, meta = prepare_params(params, hidden=HIDDEN, maze=MAZE,
                                   num_layers=NUM_LAYERS,
                                   num_outputs=NUM_OUTPUTS)
    forward = jax.jit(functools.partial(place_maze_net_forward, meta=meta))

    policy, value = forward(map_obs, place_obs, weights)
    jax.block_until_ready((policy, value))

    assert policy.shape == (BATCH, NUM_OUTPUTS), policy.shape
    assert value.shape == (BATCH,), value.shape

    ref_policy, ref_value = reference_forward(map_obs, place_obs, params,
                                              hidden=HIDDEN)
    assert jnp.allclose(policy, ref_policy, rtol=1e-3, atol=1e-3), \
        float(jnp.max(jnp.abs(policy - ref_policy)))
    assert jnp.allclose(value, ref_value, rtol=1e-3, atol=1e-3), \
        float(jnp.max(jnp.abs(value - ref_value)))
    print("KERNEL_OK")
</pallas_src>

<mosaic_0001>
module attributes {stable_mosaic.version = 11 : i64} {
  func.func @_fused_forward_kernel(%arg0: memref<2x243xf32, #tpu.memory_space<vmem>>, %arg1: memref<2x12xf32, #tpu.memory_space<vmem>>, %arg2: memref<243x400xf32, #tpu.memory_space<vmem>>, %arg3: memref<400x128xf32, #tpu.memory_space<vmem>>, %arg4: memref<128x128xf32, #tpu.memory_space<vmem>>, %arg5: memref<12x16xf32, #tpu.memory_space<vmem>>, %arg6: memref<16x16xf32, #tpu.memory_space<vmem>>, %arg7: memref<144x6xf32, #tpu.memory_space<vmem>>, %arg8: memref<6x400xf32, #tpu.memory_space<vmem>>, %arg9: memref<2x6xf32, #tpu.memory_space<vmem>>) attributes {dimension_semantics = [], scalar_prefetch = 0 : i64, scratch_operands = 0 : i64, tpu.core_type = #tpu.core_type<tc>} {
    %c0 = arith.constant 0 : index
    %c0_0 = arith.constant 0 : index
    %0 = vector.load %arg0[%c0, %c0_0] : memref<2x243xf32, #tpu.memory_space<vmem>>, vector<2x243xf32>
    %c0_1 = arith.constant 0 : index
    %c0_2 = arith.constant 0 : index
    %1 = vector.load %arg2[%c0_1, %c0_2] : memref<243x400xf32, #tpu.memory_space<vmem>>, vector<243x400xf32>
    %cst = arith.constant dense<0.000000e+00> : vector<2x400xf32>
    %2 = tpu.matmul %0, %1, %cst {dimension_numbers = #tpu.dot_dimension_numbers<[1], [0], [0], [1], [0, 0, 1, 1], [], []>} : vector<2x243xf32>, vector<243x400xf32>, vector<2x400xf32> -> vector<2x400xf32>
    %c0_3 = arith.constant 0 : index
    %c0_4 = arith.constant 0 : index
    %3 = vector.load %arg8[%c0_3, %c0_4] : memref<6x400xf32, #tpu.memory_space<vmem>>, vector<1x400xf32>
    %4 = vector.broadcast %3 : vector<1x400xf32> to vector<2x400xf32>
    %5 = arith.addf %2, %4 : vector<2x400xf32>
    %cst_5 = arith.constant 0.000000e+00 : f32
    %6 = vector.broadcast %cst_5 : f32 to vector<2x400xf32>
    %7 = arith.maximumf %5, %6 : vector<2x400xf32>
    %c0_6 = arith.constant 0 : index
    %c0_7 = arith.constant 0 : index
    %8 = vector.load %arg3[%c0_6, %c0_7] : memref<400x128xf32, #tpu.memory_space<vmem>>, vector<400x128xf32>
    %cst_8 = arith.constant dense<0.000000e+00> : vector<2x128xf32>
    %9 = tpu.matmul %7, %8, %cst_8 {dimension_numbers = #tpu.dot_dimension_numbers<[1], [0], [0], [1], [0, 0, 1, 1], [], []>} : vector<2x400xf32>, vector<400x128xf32>, vector<2x128xf32> -> vector<2x128xf32>
    %c1 = arith.constant 1 : index
    %c0_9 = arith.constant 0 : index
    %10 = vector.load %arg8[%c1, %c0_9] : memref<6x400xf32, #tpu.memory_space<vmem>>, vector<1x128xf32>
    %11 = vector.broadcast %10 : vector<1x128xf32> to vector<2x128xf32>
    %12 = arith.addf %9, %11 : vector<2x128xf32>
    %cst_10 = arith.constant 0.000000e+00 : f32
    %13 = vector.broadcast %cst_10 : f32 to vector<2x128xf32>
    %14 = arith.maximumf %12, %13 : vector<2x128xf32>
    %c0_11 = arith.constant 0 : index
    %c0_12 = arith.constant 0 : index
    %15 = vector.load %arg4[%c0_11, %c0_12] : memref<128x128xf32, #tpu.memory_space<vmem>>, vector<128x128xf32>
    %cst_13 = arith.constant dense<0.000000e+00> : vector<2x128xf32>
    %16 = tpu.matmul %14, %15, %cst_13 {dimension_numbers = #tpu.dot_dimension_numbers<[1], [0], [0], [1], [0, 0, 1, 1], [], []>} : vector<2x128xf32>, vector<128x128xf32>, vector<2x128xf32> -> vector<2x128xf32>
    %c2 = arith.constant 2 : index
    %c0_14 = arith.constant 0 : index
    %17 = vector.load %arg8[%c2, %c0_14] : memref<6x400xf32, #tpu.memory_space<vmem>>, vector<1x128xf32>
    %18 = vector.broadcast %17 : vector<1x128xf32> to vector<2x128xf32>
    %19 = arith.addf %16, %18 : vector<2x128xf32>
    %cst_15 = arith.constant 0.000000e+00 : f32
    %20 = vector.broadcast %cst_15 : f32 to vector<2x128xf32>
    %21 = arith.maximumf %19, %20 : vector<2x128xf32>
    %c0_16 = arith.constant 0 : index
    %c0_17 = arith.constant 0 : index
    %22 = vector.load %arg1[%c0_16, %c0_17] : memref<2x12xf32, #tpu.memory_space<vmem>>, vector<2x12xf32>
    %c0_18 = arith.constant 0 : index
    %c0_19 = arith.constant 0 : index
    %23 = vector.load %arg5[%c0_18, %c0_19] : memref<12x16xf32, #tpu.memory_space<vmem>>, vector<12x16xf32>
    %cst_20 = arith.constant dense<0.000000e+00> : vector<2x16xf32>
    %24 = tpu.matmul %22, %23, %cst_20 {dimension_numbers = #tpu.dot_dimension_numbers<[1], [0], [0], [1], [0, 0, 1, 1], [], []>} : vector<2x12xf32>, vector<12x16xf32>, vector<2x16xf32> -> vector<2x16xf32>
    %c3 = arith.constant 3 : index
    %c0_21 = arith.constant 0 : index
    %25 = vector.load %arg8[%c3, %c0_21] : memref<6x400xf32, #tpu.memory_space<vmem>>, vector<1x16xf32>
    %26 = vector.broadcast %25 : vector<1x16xf32> to vector<2x16xf32>
    %27 = arith.addf %24, %26 : vector<2x16xf32>
    %cst_22 = arith.constant 0.000000e+00 : f32
    %28 = vector.broadcast %cst_22 : f32 to vector<2x16xf32>
    %29 = arith.maximumf %27, %28 : vector<2x16xf32>
    %c0_23 = arith.constant 0 : index
    %c0_24 = arith.constant 0 : index
    %30 = vector.load %arg6[%c0_23, %c0_24] : memref<16x16xf32, #tpu.memory_space<vmem>>, vector<16x16xf32>
    %cst_25 = arith.constant dense<0.000000e+00> : vector<2x16xf32>
    %31 = tpu.matmul %29, %30, %cst_25 {dimension_numbers = #tpu.dot_dimension_numbers<[1], [0], [0], [1], [0, 0, 1, 1], [], []>} : vector<2x16xf32>, vector<16x16xf32>, vector<2x16xf32> -> vector<2x16xf32>
    %c4 = arith.constant 4 : index
    %c0_26 = arith.constant 0 : index
    %32 = vector.load %arg8[%c4, %c0_26] : memref<6x400xf32, #tpu.memory_space<vmem>>, vector<1x16xf32>
    %33 = vector.broadcast %32 : vector<1x16xf32> to vector<2x16xf32>
    %34 = arith.addf %31, %33 : vector<2x16xf32>
    %cst_27 = arith.constant 0.000000e+00 : f32
    %35 = vector.broadcast %cst_27 : f32 to vector<2x16xf32>
    %36 = arith.maximumf %34, %35 : vector<2x16xf32>
    %37 = tpu.concatenate %21, %36 in 1 : vector<2x128xf32>, vector<2x16xf32> -> vector<2x144xf32>
    %c0_28 = arith.constant 0 : index
    %c0_29 = arith.constant 0 : index
    %38 = vector.load %arg7[%c0_28, %c0_29] : memref<144x6xf32, #tpu.memory_space<vmem>>, vector<144x6xf32>
    %cst_30 = arith.constant dense<0.000000e+00> : vector<2x6xf32>
    %39 = tpu.matmul %37, %38, %cst_30 {dimension_numbers = #tpu.dot_dimension_numbers<[1], [0], [0], [1], [0, 0, 1, 1], [], []>} : vector<2x144xf32>, vector<144x6xf32>, vector<2x6xf32> -> vector<2x6xf32>
    %c5 = arith.constant 5 : index
    %c0_31 = arith.constant 0 : index
    %40 = vector.load %arg8[%c5, %c0_31] : memref<6x400xf32, #tpu.memory_space<vmem>>, vector<1x6xf32>
    %41 = vector.broadcast %40 : vector<1x6xf32> to vector<2x6xf32>
    %42 = arith.addf %39, %41 : vector<2x6xf32>
    %c0_32 = arith.constant 0 : index
    %c0_33 = arith.constant 0 : index
    %43 = vector.load %arg9[%c0_32, %c0_33] : memref<2x6xf32, #tpu.memory_space<vmem>>, vector<2x6xf32>
    tpu.vector_store %arg9[%c0_32, %c0_33], %42 {strides = array<i32>} : memref<2x6xf32, #tpu.memory_space<vmem>>, vector<2x6xf32>,
    return
  }
}

</mosaic_0001>

<llo_original>
// kernel: place_maze_net_forward.1
$region0: #{place_maze_net_forward.1}
  #allocation0 [shape = 'u32[]', space=smem, size = 0x4, offset = 0x4, fixed_abs, tag = 'smem constant byte address 0x4 - core index']
  #allocation1 [shape = 'u32[144,128]{1,0:T(1,128)}', space=vmem, size = 0x12000, scoped, tag = 'internal scratch']
  %s0 = inlined_call_operand.vmem [shape: f32[2,243], index: 0, kind: input, shape index: {}]
  %s1 = inlined_call_operand.vmem [shape: f32[2,12], index: 1, kind: input, shape index: {}]
  %s2 = inlined_call_operand.vmem [shape: f32[243,400], index: 2, kind: input, shape index: {}]
  %s3 = inlined_call_operand.vmem [shape: f32[400,128], index: 3, kind: input, shape index: {}]
  %s4 = inlined_call_operand.vmem [shape: f32[128,128], index: 4, kind: input, shape index: {}]
  %s5 = inlined_call_operand.vmem [shape: f32[12,16], index: 5, kind: input, shape index: {}]
  %s6 = inlined_call_operand.vmem [shape: f32[16,16], index: 6, kind: input, shape index: {}]
  %s7 = inlined_call_operand.vmem [shape: f32[144,6], index: 7, kind: input, shape index: {}]
  %s8 = inlined_call_operand.vmem [shape: f32[6,400], index: 8, kind: input, shape index: {}]
  %s9 = inlined_call_operand.vmem [shape: f32[2,6], index: 9, kind: output, shape index: {}]
  %s10 = sld [smem:[#allocation0]]
  $region46: #{place_maze_net_forward.1} parent=0
    _
  %s12 = ssub.s32 1, %s10
  %s13 = scalar_select 0, %s12, %s10
  // Predicated region
  $region2: #{place_maze_net_forward.1} parent=0 // pred_check
    _
  $region3: #{place_maze_net_forward.1} parent=0 // pred_check_branch
    %15 = sbr.rel (0) target = $region5
  $region4: #{place_maze_net_forward.1} parent=0 // pred_region
    _
  $region5: #{place_maze_net_forward.1} parent=0 // pred_fallthru
    _
  // Predicated region
  $region6: #{place_maze_net_forward.1} parent=0 // pred_check
    _
  $region7: #{place_maze_net_forward.1} parent=0 // pred_check_branch
    %17 = sbr.rel (0) target = $region9
  $region8: #{place_maze_net_forward.1} parent=0 // pred_region
    _
  $region9: #{place_maze_net_forward.1} parent=0 // pred_fallthru
    _
  // Predicated region
  $region10: #{place_maze_net_forward.1} parent=0 // pred_check
    _
  $region11: #{place_maze_net_forward.1} parent=0 // pred_check_branch
    %19 = sbr.rel (0) target = $region13
  $region12: #{place_maze_net_forward.1} parent=0 // pred_region
    _
  $region13: #{place_maze_net_forward.1} parent=0 // pred_fallthru
    _
  // Predicated region
  $region14: #{place_maze_net_forward.1} parent=0 // pred_check
    _
  $region15: #{place_maze_net_forward.1} parent=0 // pred_check_branch
    %21 = sbr.rel (0) target = $region17
  $region16: #{place_maze_net_forward.1} parent=0 // pred_region
    _
  $region17: #{place_maze_net_forward.1} parent=0 // pred_fallthru
    _
  // Predicated region
  $region18: #{place_maze_net_forward.1} parent=0 // pred_check
    _
  $region19: #{place_maze_net_forward.1} parent=0 // pred_check_branch
    %23 = sbr.rel (0) target = $region21
  $region20: #{place_maze_net_forward.1} parent=0 // pred_region
    _
  $region21: #{place_maze_net_forward.1} parent=0 // pred_fallthru
    _
  // Predicated region
  $region22: #{place_maze_net_forward.1} parent=0 // pred_check
    _
  $region23: #{place_maze_net_forward.1} parent=0 // pred_check_branch
    %25 = sbr.rel (0) target = $region25
  $region24: #{place_maze_net_forward.1} parent=0 // pred_region
    _
  $region25: #{place_maze_net_forward.1} parent=0 // pred_fallthru
    _
  // Predicated region
  $region26: #{place_maze_net_forward.1} parent=0 // pred_check
    _
  $region27: #{place_maze_net_forward.1} parent=0 // pred_check_branch
    %27 = sbr.rel (0) target = $region29
  $region28: #{place_maze_net_forward.1} parent=0 // pred_region
    _
  $region29: #{place_maze_net_forward.1} parent=0 // pred_fallthru
    _
  // Predicated region
  $region30: #{place_maze_net_forward.1} parent=0 // pred_check
    _
  $region31: #{place_maze_net_forward.1} parent=0 // pred_check_branch
    %29 = sbr.rel (0) target = $region33
  $region32: #{place_maze_net_forward.1} parent=0 // pred_region
    _
  $region33: #{place_maze_net_forward.1} parent=0 // pred_fallthru
    _
  // Predicated region
  $region34: #{place_maze_net_forward.1} parent=0 // pred_check
    _
  $region35: #{place_maze_net_forward.1} parent=0 // pred_check_branch
    %31 = sbr.rel (0) target = $region37
  $region36: #{place_maze_net_forward.1} parent=0 // pred_region
    _
  $region37: #{place_maze_net_forward.1} parent=0 // pred_fallthru
    _
  %v32 = vld [vmem:[%s0] sm:$0xf]
  %v33 = vld [vmem:[%s2] sm:$0xff]
  %v34 = vld [vmem:[%s2 + $0x8] sm:$0xff]
  %v35 = vld [vmem:[%s2 + $0x10] sm:$0xff]
  %v36 = vld [vmem:[%s2 + $0x18] sm:$0xff]
  %v37 = vld [vmem:[%s2 + $0x20] sm:$0xff]
  %v38 = vld [vmem:[%s2 + $0x28] sm:$0xff]
  %v39 = vld [vmem:[%s2 + $0x30] sm:$0xff]
  %v40 = vld [vmem:[%s2 + $0x38] sm:$0xff]
  %v41 = vld [vmem:[%s2 + $0x40] sm:$0xff]
  %v42 = vld [vmem:[%s2 + $0x48] sm:$0xff]
  %v43 = vld [vmem:[%s2 + $0x50] sm:$0xff]
  %v44 = vld [vmem:[%s2 + $0x58] sm:$0xff]
  %v45 = vld [vmem:[%s2 + $0x60] sm:$0xff]
  %v46 = vld [vmem:[%s2 + $0x68] sm:$0xff]
  %v47 = vld [vmem:[%s2 + $0x70] sm:$0xff]
  %v48 = vld [vmem:[%s2 + $0x78] sm:$0xff]
  %v49 = vld [vmem:[%s2 + $0x80] sm:$0xff]
  %v50 = vld [vmem:[%s2 + $0x88] sm:$0xff]
  %v51 = vld [vmem:[%s2 + $0x90] sm:$0xff]
  %v52 = vld [vmem:[%s2 + $0x98] sm:$0xff]
  %v53 = vld [vmem:[%s2 + $0xa0] sm:$0xff]
  %v54 = vld [vmem:[%s2 + $0xa8] sm:$0xff]
  %v55 = vld [vmem:[%s2 + $0xb0] sm:$0xff]
  %v56 = vld [vmem:[%s2 + $0xb8] sm:$0xff]
  %v57 = vld [vmem:[%s2 + $0xc0] sm:$0xff]
  %v58 = vld [vmem:[%s2 + $0xc8] sm:$0xff]
  %v59 = vld [vmem:[%s2 + $0xd0] sm:$0xff]
  %v60 = vld [vmem:[%s2 + $0xd8] sm:$0xff]
  %v61 = vld [vmem:[%s2 + $0xe0] sm:$0xff]
  %v62 = vld [vmem:[%s2 + $0xe8] sm:$0xff]
  %v63 = vld [vmem:[%s2 + $0xf0] sm:$0xff]
  %v64 = vld [vmem:[%s2 + $0xf8] sm:$0xff]
  %v65 = vld [vmem:[%s2 + $0x100] sm:$0xff]
  %v66 = vld [vmem:[%s2 + $0x108] sm:$0xff]
  %v67 = vld [vmem:[%s2 + $0x110] sm:$0xff]
  %v68 = vld [vmem:[%s2 + $0x118] sm:$0xff]
  %v69 = vld [vmem:[%s2 + $0x120] sm:$0xff]
  %v70 = vld [vmem:[%s2 + $0x128] sm:$0xff]
  %v71 = vld [vmem:[%s2 + $0x130] sm:$0xff]
  %v72 = vld [vmem:[%s2 + $0x138] sm:$0xff]
  %v73 = vld [vmem:[%s2 + $0x140] sm:$0xff]
  %v74 = vld [vmem:[%s2 + $0x148] sm:$0xff]
  %v75 = vld [vmem:[%s2 + $0x150] sm:$0xff]
  %v76 = vld [vmem:[%s2 + $0x158] sm:$0xff]
  %v77 = vld [vmem:[%s2 + $0x160] sm:$0xff]
  %v78 = vld [vmem:[%s2 + $0x168] sm:$0xff]
  %v79 = vld [vmem:[%s2 + $0x170] sm:$0xff]
  %v80 = vld [vmem:[%s2 + $0x178] sm:$0xff]
  %v81 = vld [vmem:[%s2 + $0x180] sm:$0xff]
  %v82 = vld [vmem:[%s2 + $0x188] sm:$0xff]
  %v83 = vld [vmem:[%s2 + $0x190] sm:$0xff]
  %v84 = vld [vmem:[%s2 + $0x198] sm:$0xff]
  %v85 = vld [vmem:[%s2 + $0x1a0] sm:$0xff]
  %v86 = vld [vmem:[%s2 + $0x1a8] sm:$0xff]
  %v87 = vld [vmem:[%s2 + $0x1b0] sm:$0xff]
  %v88 = vld [vmem:[%s2 + $0x1b8] sm:$0xff]
  %v89 = vld [vmem:[%s2 + $0x1c0] sm:$0xff]
  %v90 = vld [vmem:[%s2 + $0x1c8] sm:$0xff]
  %v91 = vld [vmem:[%s2 + $0x1d0] sm:$0xff]
  %v92 = vld [vmem:[%s2 + $0x1d8] sm:$0xff]
  %v93 = vld [vmem:[%s2 + $0x1e0] sm:$0xff]
  %v94 = vld [vmem:[%s2 + $0x1e8] sm:$0xff]
  %v95 = vld [vmem:[%s2 + $0x1f0] sm:$0xff]
  %v96 = vld [vmem:[%s2 + $0x1f8] sm:$0xff]
  %v97 = vld [vmem:[%s2 + $0x200] sm:$0xff]
  %v98 = vld [vmem:[%s2 + $0x208] sm:$0xff]
  %v99 = vld [vmem:[%s2 + $0x210] sm:$0xff]
  %v100 = vld [vmem:[%s2 + $0x218] sm:$0xff]
  %v101 = vld [vmem:[%s2 + $0x220] sm:$0xff]
  %v102 = vld [vmem:[%s2 + $0x228] sm:$0xff]
  %v103 = vld [vmem:[%s2 + $0x230] sm:$0xff]
  %v104 = vld [vmem:[%s2 + $0x238] sm:$0xff]
  %v105 = vld [vmem:[%s2 + $0x240] sm:$0xff]
  %v106 = vld [vmem:[%s2 + $0x248] sm:$0xff]
  %v107 = vld [vmem:[%s2 + $0x250] sm:$0xff]
  %v108 = vld [vmem:[%s2 + $0x258] sm:$0xff]
  %v109 = vld [vmem:[%s2 + $0x260] sm:$0xff]
  %v110 = vld [vmem:[%s2 + $0x268] sm:$0xff]
  %v111 = vld [vmem:[%s2 + $0x270] sm:$0xff]
  %v112 = vld [vmem:[%s2 + $0x278] sm:$0xff]
  %v113 = vld [vmem:[%s2 + $0x280] sm:$0xff]
  %v114 = vld [vmem:[%s2 + $0x288] sm:$0xff]
  %v115 = vld [vmem:[%s2 + $0x290] sm:$0xff]
  %v116 = vld [vmem:[%s2 + $0x298] sm:$0xff]
  %v117 = vld [vmem:[%s2 + $0x2a0] sm:$0xff]
  %v118 = vld [vmem:[%s2 + $0x2a8] sm:$0xff]
  %v119 = vld [vmem:[%s2 + $0x2b0] sm:$0xff]
  %v120 = vld [vmem:[%s2 + $0x2b8] sm:$0xff]
  %v121 = vld [vmem:[%s2 + $0x2c0] sm:$0xff]
  %v122 = vld [vmem:[%s2 + $0x2c8] sm:$0xff]
  %v123 = vld [vmem:[%s2 + $0x2d0] sm:$0xff]
  %v124 = vld [vmem:[%s2 + $0x2d8] sm:$0xff]
  %v125 = vld [vmem:[%s2 + $0x2e0] sm:$0xff]
  %v126 = vld [vmem:[%s2 + $0x2e8] sm:$0xff]
  %v127 = vld [vmem:[%s2 + $0x2f0] sm:$0xff]
  %v128 = vld [vmem:[%s2 + $0x2f8] sm:$0xff]
  %v129 = vld [vmem:[%s2 + $0x300] sm:$0xff]
  %v130 = vld [vmem:[%s2 + $0x308] sm:$0xff]
  %v131 = vld [vmem:[%s2 + $0x310] sm:$0xff]
  %v132 = vld [vmem:[%s2 + $0x318] sm:$0xff]
  %v133 = vld [vmem:[%s2 + $0x320] sm:$0xff]
  %v134 = vld [vmem:[%s2 + $0x328] sm:$0xff]
  %v135 = vld [vmem:[%s2 + $0x330] sm:$0xff]
  %v136 = vld [vmem:[%s2 + $0x338] sm:$0xff]
  %v137 = vld [vmem:[%s2 + $0x340] sm:$0xff]
  %v138 = vld [vmem:[%s2 + $0x348] sm:$0xff]
  %v139 = vld [vmem:[%s2 + $0x350] sm:$0xff]
  %v140 = vld [vmem:[%s2 + $0x358] sm:$0xff]
  %v141 = vld [vmem:[%s2 + $0x360] sm:$0xff]
  %v142 = vld [vmem:[%s2 + $0x368] sm:$0xff]
  %v143 = vld [vmem:[%s2 + $0x370] sm:$0xff]
  %v144 = vld [vmem:[%s2 + $0x378] sm:$0xff]
  %v145 = vld [vmem:[%s2 + $0x380] sm:$0xff]
  %v146 = vld [vmem:[%s2 + $0x388] sm:$0xff]
  %v147 = vld [vmem:[%s2 + $0x390] sm:$0xff]
  %v148 = vld [vmem:[%s2 + $0x398] sm:$0xff]
  %v149 = vld [vmem:[%s2 + $0x3a0] sm:$0xff]
  %v150 = vld [vmem:[%s2 + $0x3a8] sm:$0xff]
  %v151 = vld [vmem:[%s2 + $0x3b0] sm:$0xff]
  %v152 = vld [vmem:[%s2 + $0x3b8] sm:$0xff]
  %v153 = vld [vmem:[%s2 + $0x3c0] sm:$0x7]
  %v154 = vld [vmem:[%s2 + $0x3c8] sm:$0x7]
  %v155 = vld [vmem:[%s2 + $0x3d0] sm:$0x7]
  %v156 = vld [vmem:[%s2 + $0x3d8] sm:$0x7]
  %v157 = vld [vmem:[%s8] ss:$8 sm:$0xf]
  %v159 = vlaneseq
  %v160 = vshrl.u32 %v159, 7
  %v161 = vsub.s32 0, %v160
  %v162 = vrot.slane %v157, %v161
  %v163 = vlaneseq
  %v164 = vshrl.u32 %v163, 7
  %v165 = vsub.s32 1, %v164
  %v166 = vrot.slane %v157, %v165
  %v167 = vlaneseq
  %v168 = vshrl.u32 %v167, 7
  %v169 = vsub.s32 2, %v168
  %v170 = vrot.slane %v157, %v169
  %v171 = vlaneseq
  %v172 = vshrl.u32 %v171, 7
  %v173 = vsub.s32 3, %v172
  %v174 = vrot.slane %v157, %v173
  %v181 = vunpack.c.l.s4 1983009808
  %v182 = vunpack.c.0.s8 %v181
  %v183 = vlaneseq
  %v184 = vshrl.u32 %v183, 7
  %v185 = vsub.s32 %v182, %v184
  %v186 = vrot.slane %v32, %v185
  %v187 = vcombine.high %v186, %v186
  %vm189 = vcmask 941056
  %v190 = vsel %vm189, %v187, 0
  %vm192 = vcmask 1042432
  %v194 = vsel %vm192, %v153, 0
  %v197 = vsel %vm192, %v154, 0
  %v200 = vsel %vm192, %v155, 0
  %v203 = vsel %vm192, %v156, 0
  %205 = vmatprep.subr.mxu0 %v34
  %206 = vmatpush1.msra.mxu0 %v33
  %207 = vmatprep.subr.mxu0 %v38
  %208 = vmatpush1.msra.mxu0 %v37
  %209 = vmatprep.subr.mxu0 %v42
  %210 = vmatpush1.msra.mxu0 %v41
  %211 = vmatprep.subr.mxu0 %v46
  %212 = vmatpush1.msra.mxu0 %v45
  %213 = vmatprep.subr.mxu0 %v50
  %214 = vmatpush1.msra.mxu0 %v49
  %215 = vmatprep.subr.mxu0 %v54
  %216 = vmatpush1.msra.mxu0 %v53
  %217 = vmatprep.subr.mxu0 %v58
  %218 = vmatpush1.msra.mxu0 %v57
  %219 = vmatprep.subr.mxu0 %v62
  %220 = vmatpush1.msra.mxu0 %v61
  %221 = vmatprep.subr.mxu0 %v66
  %222 = vmatpush1.msra.mxu0 %v65
  %223 = vmatprep.subr.mxu0 %v70
  %224 = vmatpush1.msra.mxu0 %v69
  %225 = vmatprep.subr.mxu0 %v74
  %226 = vmatpush1.msra.mxu0 %v73
  %227 = vmatprep.subr.mxu0 %v78
  %228 = vmatpush1.msra.mxu0 %v77
  %229 = vmatprep.subr.mxu0 %v82
  %230 = vmatpush1.msra.mxu0 %v81
  %231 = vmatprep.subr.mxu0 %v86
  %232 = vmatpush1.msra.mxu0 %v85
  %233 = vmatprep.subr.mxu0 %v90
  %234 = vmatpush1.msra.mxu0 %v89
  %235 = vmatprep.subr.mxu0 %v94
  %236 = vmatpush1.msra.mxu0 %v93
  %237 = vmatprep.subr.mxu0 %v98
  %238 = vmatpush1.msra.mxu0 %v97
  %239 = vmatprep.subr.mxu0 %v102
  %240 = vmatpush1.msra.mxu0 %v101
  %241 = vmatprep.subr.mxu0 %v106
  %242 = vmatpush1.msra.mxu0 %v105
  %243 = vmatprep.subr.mxu0 %v110
  %244 = vmatpush1.msra.mxu0 %v109
  %245 = vmatprep.subr.mxu0 %v114
  %246 = vmatpush1.msra.mxu0 %v113
  %247 = vmatprep.subr.mxu0 %v118
  %248 = vmatpush1.msra.mxu0 %v117
  %249 = vmatprep.subr.mxu0 %v122
  %250 = vmatpush1.msra.mxu0 %v121
  %251 = vmatprep.subr.mxu0 %v126
  %252 = vmatpush1.msra.mxu0 %v125
  %253 = vmatprep.subr.mxu0 %v130
  %254 = vmatpush1.msra.mxu0 %v129
  %255 = vmatprep.subr.mxu0 %v134
  %256 = vmatpush1.msra.mxu0 %v133
  %257 = vmatprep.subr.mxu0 %v138
  %258 = vmatpush1.msra.mxu0 %v137
  %259 = vmatprep.subr.mxu0 %v142
  %260 = vmatpush1.msra.mxu0 %v141
  %261 = vmatprep.subr.mxu0 %v146
  %262 = vmatpush1.msra.mxu0 %v145
  %263 = vmatprep.subr.mxu0 %v150
  %264 = vmatpush1.msra.mxu0 %v149
  %265 = vmatprep.subr.mxu0 %v197
  %266 = vmatpush1.msra.mxu0 %v194
  %267 = vmatprep.subr.mxu0 0.0
  %268 = vmatpush1.msra.mxu0 0.0
  %269 = vmatprep.mubr.f32.mxu0 %v190
  %270 = vmatmul.mubr.f32.gmra.mrb[0].mxu0 %v186
  %v271 = vpop.f32.mrb[0].mxu0
  %v272 = vadd.f32 %v162, %v271
  %v273 = vpop.f32.mrb[0].mxu0
  %v274 = vadd.f32 %v166, %v273
  %275 = vdwg.mxu0
  %276 = vmatprep.subr.mxu0 %v36
  %277 = vmatpush1.msra.mxu0 %v35
  %278 = vmatprep.subr.mxu0 %v40
  %279 = vmatpush1.msra.mxu0 %v39
  %280 = vmatprep.subr.mxu0 %v44
  %281 = vmatpush1.msra.mxu0 %v43
  %282 = vmatprep.subr.mxu0 %v48
  %283 = vmatpush1.msra.mxu0 %v47
  %284 = vmatprep.subr.mxu0 %v52
  %285 = vmatpush1.msra.mxu0 %v51
  %286 = vmatprep.subr.mxu0 %v56
  %287 = vmatpush1.msra.mxu0 %v55
  %288 = vmatprep.subr.mxu0 %v60
  %289 = vmatpush1.msra.mxu0 %v59
  %290 = vmatprep.subr.mxu0 %v64
  %291 = vmatpush1.msra.mxu0 %v63
  %292 = vmatprep.subr.mxu0 %v68
  %293 = vmatpush1.msra.mxu0 %v67
  %294 = vmatprep.subr.mxu0 %v72
  %295 = vmatpush1.msra.mxu0 %v71
  %296 = vmatprep.subr.mxu0 %v76
  %297 = vmatpush1.msra.mxu0 %v75
  %298 = vmatprep.subr.mxu0 %v80
  %299 = vmatpush1.msra.mxu0 %v79
  %300 = vmatprep.subr.mxu0 %v84
  %301 = vmatpush1.msra.mxu0 %v83
  %302 = vmatprep.subr.mxu0 %v88
  %303 = vmatpush1.msra.mxu0 %v87
  %304 = vmatprep.subr.mxu0 %v92
  %305 = vmatpush1.msra.mxu0 %v91
  %306 = vmatprep.subr.mxu0 %v96
  %307 = vmatpush1.msra.mxu0 %v95
  %308 = vmatprep.subr.mxu0 %v100
  %309 = vmatpush1.msra.mxu0 %v99
  %310 = vmatprep.subr.mxu0 %v104
  %311 = vmatpush1.msra.mxu0 %v103
  %312 = vmatprep.subr.mxu0 %v108
  %313 = vmatpush1.msra.mxu0 %v107
  %314 = vmatprep.subr.mxu0 %v112
  %315 = vmatpush1.msra.mxu0 %v111
  %316 = vmatprep.subr.mxu0 %v116
  %317 = vmatpush1.msra.mxu0 %v115
  %318 = vmatprep.subr.mxu0 %v120
  %319 = vmatpush1.msra.mxu0 %v119
  %320 = vmatprep.subr.mxu0 %v124
  %321 = vmatpush1.msra.mxu0 %v123
  %322 = vmatprep.subr.mxu0 %v128
  %323 = vmatpush1.msra.mxu0 %v127
  %324 = vmatprep.subr.mxu0 %v132
  %325 = vmatpush1.msra.mxu0 %v131
  %326 = vmatprep.subr.mxu0 %v136
  %327 = vmatpush1.msra.mxu0 %v135
  %328 = vmatprep.subr.mxu0 %v140
  %329 = vmatpush1.msra.mxu0 %v139
  %330 = vmatprep.subr.mxu0 %v144
  %331 = vmatpush1.msra.mxu0 %v143
  %332 = vmatprep.subr.mxu0 %v148
  %333 = vmatpush1.msra.mxu0 %v147
  %334 = vmatprep.subr.mxu0 %v152
  %335 = vmatpush1.msra.mxu0 %v151
  %336 = vmatprep.subr.mxu0 %v203
  %337 = vmatpush1.msra.mxu0 %v200
  %338 = vmatprep.subr.mxu0 0.0
  %339 = vmatpush1.msra.mxu0 0.0
  %340 = vmatprep.mubr.f32.mxu0 %v190
  %341 = vmatmul.mubr.f32.gmra.mrb[0].mxu0 %v186
  %v342 = vpop.f32.mrb[0].mxu0
  %v343 = vadd.f32 %v170, %v342
  %v344 = vpop.f32.mrb[0].mxu0
  %v345 = vadd.f32 %v174, %v344
  %346 = vdwg.mxu0
  %v347 = vmax.f32 %v272, 0.0
  %v348 = vmax.f32 %v274, 0.0
  %v349 = vmax.f32 %v343, 0.0
  %v350 = vmax.f32 %v345, 0.0
  %v351 = vld [vmem:[%s3] sm:$0xff]
  %v352 = vld [vmem:[%s3 + $0x8] sm:$0xff]
  %v353 = vld [vmem:[%s3 + $0x10] sm:$0xff]
  %v354 = vld [vmem:[%s3 + $0x18] sm:$0xff]
  %v355 = vld [vmem:[%s3 + $0x20] sm:$0xff]
  %v356 = vld [vmem:[%s3 + $0x28] sm:$0xff]
  %v357 = vld [vmem:[%s3 + $0x30] sm:$0xff]
  %v358 = vld [vmem:[%s3 + $0x38] sm:$0xff]
  %v359 = vld [vmem:[%s3 + $0x40] sm:$0xff]
  %v360 = vld [vmem:[%s3 + $0x48] sm:$0xff]
  %v361 = vld [vmem:[%s3 + $0x50] sm:$0xff]
  %v362 = vld [vmem:[%s3 + $0x58] sm:$0xff]
  %v363 = vld [vmem:[%s3 + $0x60] sm:$0xff]
  %v364 = vld [vmem:[%s3 + $0x68] sm:$0xff]
  %v365 = vld [vmem:[%s3 + $0x70] sm:$0xff]
  %v366 = vld [vmem:[%s3 + $0x78] sm:$0xff]
  %v367 = vld [vmem:[%s3 + $0x80] sm:$0xff]
  %v368 = vld [vmem:[%s3 + $0x88] sm:$0xff]
  %v369 = vld [vmem:[%s3 + $0x90] sm:$0xff]
  %v370 = vld [vmem:[%s3 + $0x98] sm:$0xff]
  %v371 = vld [vmem:[%s3 + $0xa0] sm:$0xff]
  %v372 = vld [vmem:[%s3 + $0xa8] sm:$0xff]
  %v373 = vld [vmem:[%s3 + $0xb0] sm:$0xff]
  %v374 = vld [vmem:[%s3 + $0xb8] sm:$0xff]
  %v375 = vld [vmem:[%s3 + $0xc0] sm:$0xff]
  %v376 = vld [vmem:[%s3 + $0xc8] sm:$0xff]
  %v377 = vld [vmem:[%s3 + $0xd0] sm:$0xff]
  %v378 = vld [vmem:[%s3 + $0xd8] sm:$0xff]
  %v379 = vld [vmem:[%s3 + $0xe0] sm:$0xff]
  %v380 = vld [vmem:[%s3 + $0xe8] sm:$0xff]
  %v381 = vld [vmem:[%s3 + $0xf0] sm:$0xff]
  %v382 = vld [vmem:[%s3 + $0xf8] sm:$0xff]
  %v383 = vld [vmem:[%s3 + $0x100] sm:$0xff]
  %v384 = vld [vmem:[%s3 + $0x108] sm:$0xff]
  %v385 = vld [vmem:[%s3 + $0x110] sm:$0xff]
  %v386 = vld [vmem:[%s3 + $0x118] sm:$0xff]
  %v387 = vld [vmem:[%s3 + $0x120] sm:$0xff]
  %v388 = vld [vmem:[%s3 + $0x128] sm:$0xff]
  %v389 = vld [vmem:[%s3 + $0x130] sm:$0xff]
  %v390 = vld [vmem:[%s3 + $0x138] sm:$0xff]
  %v391 = vld [vmem:[%s3 + $0x140] sm:$0xff]
  %v392 = vld [vmem:[%s3 + $0x148] sm:$0xff]
  %v393 = vld [vmem:[%s3 + $0x150] sm:$0xff]
  %v394 = vld [vmem:[%s3 + $0x158] sm:$0xff]
  %v395 = vld [vmem:[%s3 + $0x160] sm:$0xff]
  %v396 = vld [vmem:[%s3 + $0x168] sm:$0xff]
  %v397 = vld [vmem:[%s3 + $0x170] sm:$0xff]
  %v398 = vld [vmem:[%s3 + $0x178] sm:$0xff]
  %v399 = vld [vmem:[%s3 + $0x180] sm:$0xff]
  %v400 = vld [vmem:[%s3 + $0x188] sm:$0xff]
  %v401 = vld [vmem:[%s8 + $0x1] ss:$0 sm:$0xff]
  %vm402 = vcmask 130048
  %v404 = vsel %vm402, %v350, 0
  %406 = vmatprep.subr.mxu0 0.0
  %407 = vmatpush1.msra.mxu0 %v351
  %408 = vmatprep.subr.mxu0 0.0
  %409 = vmatpush1.msra.mxu0 %v352
  %410 = vmatprep.subr.mxu0 0.0
  %411 = vmatpush1.msra.mxu0 %v353
  %412 = vmatprep.subr.mxu0 0.0
  %413 = vmatpush1.msra.mxu0 %v354
  %414 = vmatprep.subr.mxu0 0.0
  %415 = vmatpush1.msra.mxu0 %v355
  %416 = vmatprep.subr.mxu0 0.0
  %417 = vmatpush1.msra.mxu0 %v356
  %418 = vmatprep.subr.mxu0 0.0
  %419 = vmatpush1.msra.mxu0 %v357
  %420 = vmatprep.subr.mxu0 0.0
  %421 = vmatpush1.msra.mxu0 %v358
  %422 = vmatprep.subr.mxu0 0.0
  %423 = vmatpush1.msra.mxu0 %v359
  %424 = vmatprep.subr.mxu0 0.0
  %425 = vmatpush1.msra.mxu0 %v360
  %426 = vmatprep.subr.mxu0 0.0
  %427 = vmatpush1.msra.mxu0 %v361
  %428 = vmatprep.subr.mxu0 0.0
  %429 = vmatpush1.msra.mxu0 %v362
  %430 = vmatprep.subr.mxu0 0.0
  %431 = vmatpush1.msra.mxu0 %v363
  %432 = vmatprep.subr.mxu0 0.0
  %433 = vmatpush1.msra.mxu0 %v364
  %434 = vmatprep.subr.mxu0 0.0
  %435 = vmatpush1.msra.mxu0 %v365
  %436 = vmatprep.subr.mxu0 0.0
  %437 = vmatpush1.msra.mxu0 %v366
  %438 = vmatprep.subr.mxu0 0.0
  %439 = vmatpush1.msra.mxu0 %v367
  %440 = vmatprep.subr.mxu0 0.0
  %441 = vmatpush1.msra.mxu0 %v368
  %442 = vmatprep.subr.mxu0 0.0
  %443 = vmatpush1.msra.mxu0 %v369
  %444 = vmatprep.subr.mxu0 0.0
  %445 = vmatpush1.msra.mxu0 %v370
  %446 = vmatprep.subr.mxu0 0.0
  %447 = vmatpush1.msra.mxu0 %v371
  %448 = vmatprep.subr.mxu0 0.0
  %449 = vmatpush1.msra.mxu0 %v372
  %450 = vmatprep.subr.mxu0 0.0
  %451 = vmatpush1.msra.mxu0 %v373
  %452 = vmatprep.subr.mxu0 0.0
  %453 = vmatpush1.msra.mxu0 %v374
  %454 = vmatprep.subr.mxu0 0.0
  %455 = vmatpush1.msra.mxu0 %v375
  %456 = vmatprep.subr.mxu0 0.0
  %457 = vmatpush1.msra.mxu0 %v376
  %458 = vmatprep.subr.mxu0 0.0
  %459 = vmatpush1.msra.mxu0 %v377
  %460 = vmatprep.subr.mxu0 0.0
  %461 = vmatpush1.msra.mxu0 %v378
  %462 = vmatprep.subr.mxu0 0.0
  %463 = vmatpush1.msra.mxu0 %v379
  %464 = vmatprep.subr.mxu0 0.0
  %465 = vmatpush1.msra.mxu0 %v380
  %466 = vmatprep.subr.mxu0 0.0
  %467 = vmatpush1.msra.mxu0 %v381
  %468 = vmatprep.subr.mxu0 0.0
  %469 = vmatpush1.msra.mxu0 %v382
  %470 = vmatprep.mubr.f32.mxu0 %v348
  %471 = vmatmul.mubr.f32.gmra.mrb[0].mxu0 %v347
  %v472 = vpop.f32.mrb[0].mxu0
  %v473 = vadd.f32 %v401, %v472
  %v474 = vpop.f32.mrb[0].mxu0
  %475 = vdwg.mxu0
  %476 = vmatprep.subr.mxu0 0.0
  %477 = vmatpush1.msra.mxu0 %v383
  %478 = vmatprep.subr.mxu0 0.0
  %479 = vmatpush1.msra.mxu0 %v384
  %480 = vmatprep.subr.mxu0 0.0
  %481 = vmatpush1.msra.mxu0 %v385
  %482 = vmatprep.subr.mxu0 0.0
  %483 = vmatpush1.msra.mxu0 %v386
  %484 = vmatprep.subr.mxu0 0.0
  %485 = vmatpush1.msra.mxu0 %v387
  %486 = vmatprep.subr.mxu0 0.0
  %487 = vmatpush1.msra.mxu0 %v388
  %488 = vmatprep.subr.mxu0 0.0
  %489 = vmatpush1.msra.mxu0 %v389
  %490 = vmatprep.subr.mxu0 0.0
  %491 = vmatpush1.msra.mxu0 %v390
  %492 = vmatprep.subr.mxu0 0.0
  %493 = vmatpush1.msra.mxu0 %v391
  %494 = vmatprep.subr.mxu0 0.0
  %495 = vmatpush1.msra.mxu0 %v392
  %496 = vmatprep.subr.mxu0 0.0
  %497 = vmatpush1.msra.mxu0 %v393
  %498 = vmatprep.subr.mxu0 0.0
  %499 = vmatpush1.msra.mxu0 %v394
  %500 = vmatprep.subr.mxu0 0.0
  %501 = vmatpush1.msra.mxu0 %v395
  %502 = vmatprep.subr.mxu0 0.0
  %503 = vmatpush1.msra.mxu0 %v396
  %504 = vmatprep.subr.mxu0 0.0
  %505 = vmatpush1.msra.mxu0 %v397
  %506 = vmatprep.subr.mxu0 0.0
  %507 = vmatpush1.msra.mxu0 %v398
  %508 = vmatprep.subr.mxu0 0.0
  %509 = vmatpush1.msra.mxu0 %v399
  %510 = vmatprep.subr.mxu0 0.0
  %511 = vmatpush1.msra.mxu0 %v400
  %512 = vmatprep.subr.mxu0 0.0
  %513 = vmatpush1.msra.mxu0 0.0
  %514 = vmatprep.subr.mxu0 0.0
  %515 = vmatpush1.msra.mxu0 0.0
  %516 = vmatprep.subr.mxu0 0.0
  %517 = vmatpush1.msra.mxu0 0.0
  %518 = vmatprep.subr.mxu0 0.0
  %519 = vmatpush1.msra.mxu0 0.0
  %520 = vmatprep.subr.mxu0 0.0
  %521 = vmatpush1.msra.mxu0 0.0
  %522 = vmatprep.subr.mxu0 0.0
  %523 = vmatpush1.msra.mxu0 0.0
  %524 = vmatprep.subr.mxu0 0.0
  %525 = vmatpush1.msra.mxu0 0.0
  %526 = vmatprep.subr.mxu0 0.0
  %527 = vmatpush1.msra.mxu0 0.0
  %528 = vmatprep.subr.mxu0 0.0
  %529 = vmatpush1.msra.mxu0 0.0
  %530 = vmatprep.subr.mxu0 0.0
  %531 = vmatpush1.msra.mxu0 0.0
  %532 = vmatprep.subr.mxu0 0.0
  %533 = vmatpush1.msra.mxu0 0.0
  %534 = vmatprep.subr.mxu0 0.0
  %535 = vmatpush1.msra.mxu0 0.0
  %536 = vmatprep.subr.mxu0 0.0
  %537 = vmatpush1.msra.mxu0 0.0
  %538 = vmatprep.subr.mxu0 0.0
  %539 = vmatpush1.msra.mxu0 0.0
  %540 = vmatprep.mubr.f32.mxu0 %v404
  %541 = vmatmul.mubr.f32.gmra.mrb[0].mxu0 %v349
  %v542 = vpop.f32.mrb[0].mxu0
  %v543 = vadd.f32 %v473, %v542
  %v544 = vpop.f32.mrb[0].mxu0
  %545 = vdwg.mxu0
  %v546 = vmax.f32 %v543, 0.0
  %v547 = vld [vmem:[%s4] sm:$0xff]
  %v548 = vld [vmem:[%s4 + $0x8] sm:$0xff]
  %v549 = vld [vmem:[%s4 + $0x10] sm:$0xff]
  %v550 = vld [vmem:[%s4 + $0x18] sm:$0xff]
  %v551 = vld [vmem:[%s4 + $0x20] sm:$0xff]
  %v552 = vld [vmem:[%s4 + $0x28] sm:$0xff]
  %v553 = vld [vmem:[%s4 + $0x30] sm:$0xff]
  %v554 = vld [vmem:[%s4 + $0x38] sm:$0xff]
  %v555 = vld [vmem:[%s4 + $0x40] sm:$0xff]
  %v556 = vld [vmem:[%s4 + $0x48] sm:$0xff]
  %v557 = vld [vmem:[%s4 + $0x50] sm:$0xff]
  %v558 = vld [vmem:[%s4 + $0x58] sm:$0xff]
  %v559 = vld [vmem:[%s4 + $0x60] sm:$0xff]
  %v560 = vld [vmem:[%s4 + $0x68] sm:$0xff]
  %v561 = vld [vmem:[%s4 + $0x70] sm:$0xff]
  %v562 = vld [vmem:[%s4 + $0x78] sm:$0xff]
  %v563 = vld [vmem:[%s8 + $0x2] ss:$0 sm:$0xff]
  %564 = vmatprep.subr.mxu0 0.0
  %565 = vmatpush1.msra.mxu0 %v547
  %566 = vmatprep.subr.mxu0 0.0
  %567 = vmatpush1.msra.mxu0 %v548
  %568 = vmatprep.subr.mxu0 0.0
  %569 = vmatpush1.msra.mxu0 %v549
  %570 = vmatprep.subr.mxu0 0.0
  %571 = vmatpush1.msra.mxu0 %v550
  %572 = vmatprep.subr.mxu0 0.0
  %573 = vmatpush1.msra.mxu0 %v551
  %574 = vmatprep.subr.mxu0 0.0
  %575 = vmatpush1.msra.mxu0 %v552
  %576 = vmatprep.subr.mxu0 0.0
  %577 = vmatpush1.msra.mxu0 %v553
  %578 = vmatprep.subr.mxu0 0.0
  %579 = vmatpush1.msra.mxu0 %v554
  %580 = vmatprep.subr.mxu0 0.0
  %581 = vmatpush1.msra.mxu0 %v555
  %582 = vmatprep.subr.mxu0 0.0
  %583 = vmatpush1.msra.mxu0 %v556
  %584 = vmatprep.subr.mxu0 0.0
  %585 = vmatpush1.msra.mxu0 %v557
  %586 = vmatprep.subr.mxu0 0.0
  %587 = vmatpush1.msra.mxu0 %v558
  %588 = vmatprep.subr.mxu0 0.0
  %589 = vmatpush1.msra.mxu0 %v559
  %590 = vmatprep.subr.mxu0 0.0
  %591 = vmatpush1.msra.mxu0 %v560
  %592 = vmatprep.subr.mxu0 0.0
  %593 = vmatpush1.msra.mxu0 %v561
  %594 = vmatprep.subr.mxu0 0.0
  %595 = vmatpush1.msra.mxu0 %v562
  %596 = vmatprep.subr.mxu0 0.0
  %597 = vmatpush1.msra.mxu0 0.0
  %598 = vmatprep.subr.mxu0 0.0
  %599 = vmatpush1.msra.mxu0 0.0
  %600 = vmatprep.subr.mxu0 0.0
  %601 = vmatpush1.msra.mxu0 0.0
  %602 = vmatprep.subr.mxu0 0.0
  %603 = vmatpush1.msra.mxu0 0.0
  %604 = vmatprep.subr.mxu0 0.0
  %605 = vmatpush1.msra.mxu0 0.0
  %606 = vmatprep.subr.mxu0 0.0
  %607 = vmatpush1.msra.mxu0 0.0
  %608 = vmatprep.subr.mxu0 0.0
  %609 = vmatpush1.msra.mxu0 0.0
  %610 = vmatprep.subr.mxu0 0.0
  %611 = vmatpush1.msra.mxu0 0.0
  %612 = vmatprep.subr.mxu0 0.0
  %613 = vmatpush1.msra.mxu0 0.0
  %614 = vmatprep.subr.mxu0 0.0
  %615 = vmatpush1.msra.mxu0 0.0
  %616 = vmatprep.subr.mxu0 0.0
  %617 = vmatpush1.msra.mxu0 0.0
  %618 = vmatprep.subr.mxu0 0.0
  %619 = vmatpush1.msra.mxu0 0.0
  %620 = vmatprep.subr.mxu0 0.0
  %621 = vmatpush1.msra.mxu0 0.0
  %622 = vmatprep.subr.mxu0 0.0
  %623 = vmatpush1.msra.mxu0 0.0
  %624 = vmatprep.subr.mxu0 0.0
  %625 = vmatpush1.msra.mxu0 0.0
  %626 = vmatprep.subr.mxu0 0.0
  %627 = vmatpush1.msra.mxu0 0.0
  %628 = vmatprep.mubr.f32.mxu0 0.0
  %629 = vmatmul.mubr.f32.gmra.mrb[0].mxu0 %v546
  %v630 = vpop.f32.mrb[0].mxu0
  %v631 = vadd.f32 %v563, %v630
  %v632 = vpop.f32.mrb[0].mxu0
  %633 = vdwg.mxu0
  %v634 = vmax.f32 %v631, 0.0
  %v635 = vld [vmem:[%s1] sm:$0x3]
  %v636 = vld [vmem:[%s5] sm:$0xff]
  %v637 = vld [vmem:[%s5 + $0x8] sm:$0xf]
  %v638 = vld [vmem:[%s8 + $0x3] ss:$0 sm:$0xff]
  %vm639 = vcmask 97280
  %v641 = vsel %vm639, %v635, 0
  %vm643 = vcmask 1043456
  %v645 = vsel %vm643, %v637, 0
  %647 = vmatprep.subr.mxu0 0.0
  %648 = vmatpush1.msra.mxu0 %v636
  %649 = vmatprep.subr.mxu0 0.0
  %650 = vmatpush1.msra.mxu0 %v645
  %651 = vmatprep.subr.mxu0 0.0
  %652 = vmatpush1.msra.mxu0 0.0
  %653 = vmatprep.subr.mxu0 0.0
  %654 = vmatpush1.msra.mxu0 0.0
  %655 = vmatprep.subr.mxu0 0.0
  %656 = vmatpush1.msra.mxu0 0.0
  %657 = vmatprep.subr.mxu0 0.0
  %658 = vmatpush1.msra.mxu0 0.0
  %659 = vmatprep.subr.mxu0 0.0
  %660 = vmatpush1.msra.mxu0 0.0
  %661 = vmatprep.subr.mxu0 0.0
  %662 = vmatpush1.msra.mxu0 0.0
  %663 = vmatprep.subr.mxu0 0.0
  %664 = vmatpush1.msra.mxu0 0.0
  %665 = vmatprep.subr.mxu0 0.0
  %666 = vmatpush1.msra.mxu0 0.0
  %667 = vmatprep.subr.mxu0 0.0
  %668 = vmatpush1.msra.mxu0 0.0
  %669 = vmatprep.subr.mxu0 0.0
  %670 = vmatpush1.msra.mxu0 0.0
  %671 = vmatprep.subr.mxu0 0.0
  %672 = vmatpush1.msra.mxu0 0.0
  %673 = vmatprep.subr.mxu0 0.0
  %674 = vmatpush1.msra.mxu0 0.0
  %675 = vmatprep.subr.mxu0 0.0
  %676 = vmatpush1.msra.mxu0 0.0
  %677 = vmatprep.subr.mxu0 0.0
  %678 = vmatpush1.msra.mxu0 0.0
  %679 = vmatprep.subr.mxu0 0.0
  %680 = vmatpush1.msra.mxu0 0.0
  %681 = vmatprep.subr.mxu0 0.0
  %682 = vmatpush1.msra.mxu0 0.0
  %683 = vmatprep.subr.mxu0 0.0
  %684 = vmatpush1.msra.mxu0 0.0
  %685 = vmatprep.subr.mxu0 0.0
  %686 = vmatpush1.msra.mxu0 0.0
  %687 = vmatprep.subr.mxu0 0.0
  %688 = vmatpush1.msra.mxu0 0.0
  %689 = vmatprep.subr.mxu0 0.0
  %690 = vmatpush1.msra.mxu0 0.0
  %691 = vmatprep.subr.mxu0 0.0
  %692 = vmatpush1.msra.mxu0 0.0
  %693 = vmatprep.subr.mxu0 0.0
  %694 = vmatpush1.msra.mxu0 0.0
  %695 = vmatprep.subr.mxu0 0.0
  %696 = vmatpush1.msra.mxu0 0.0
  %697 = vmatprep.subr.mxu0 0.0
  %698 = vmatpush1.msra.mxu0 0.0
  %699 = vmatprep.subr.mxu0 0.0
  %700 = vmatpush1.msra.mxu0 0.0
  %701 = vmatprep.subr.mxu0 0.0
  %702 = vmatpush1.msra.mxu0 0.0
  %703 = vmatprep.subr.mxu0 0.0
  %704 = vmatpush1.msra.mxu0 0.0
  %705 = vmatprep.subr.mxu0 0.0
  %706 = vmatpush1.msra.mxu0 0.0
  %707 = vmatprep.subr.mxu0 0.0
  %708 = vmatpush1.msra.mxu0 0.0
  %709 = vmatprep.subr.mxu0 0.0
  %710 = vmatpush1.msra.mxu0 0.0
  %711 = vmatprep.mubr.f32.mxu0 0.0
  %712 = vmatmul.mubr.f32.gmra.mrb[0].mxu0 %v641
  %v713 = vpop.f32.mrb[0].mxu0
  %v714 = vadd.f32 %v638, %v713
  %v715 = vpop.f32.mrb[0].mxu0
  %716 = vdwg.mxu0
  %v717 = vmax.f32 %v714, 0.0
  %v718 = vld [vmem:[%s6] sm:$0xff]
  %v719 = vld [vmem:[%s6 + $0x8] sm:$0xff]
  %v720 = vld [vmem:[%s8 + $0x4] ss:$0 sm:$0xff]
  %v722 = vsel %vm402, %v717, 0
  %724 = vmatprep.subr.mxu0 0.0
  %725 = vmatpush1.msra.mxu0 %v718
  %726 = vmatprep.subr.mxu0 0.0
  %727 = vmatpush1.msra.mxu0 %v719
  %728 = vmatprep.subr.mxu0 0.0
  %729 = vmatpush1.msra.mxu0 0.0
  %730 = vmatprep.subr.mxu0 0.0
  %731 = vmatpush1.msra.mxu0 0.0
  %732 = vmatprep.subr.mxu0 0.0
  %733 = vmatpush1.msra.mxu0 0.0
  %734 = vmatprep.subr.mxu0 0.0
  %735 = vmatpush1.msra.mxu0 0.0
  %736 = vmatprep.subr.mxu0 0.0
  %737 = vmatpush1.msra.mxu0 0.0
  %738 = vmatprep.subr.mxu0 0.0
  %739 = vmatpush1.msra.mxu0 0.0
  %740 = vmatprep.subr.mxu0 0.0
  %741 = vmatpush1.msra.mxu0 0.0
  %742 = vmatprep.subr.mxu0 0.0
  %743 = vmatpush1.msra.mxu0 0.0
  %744 = vmatprep.subr.mxu0 0.0
  %745 = vmatpush1.msra.mxu0 0.0
  %746 = vmatprep.subr.mxu0 0.0
  %747 = vmatpush1.msra.mxu0 0.0
  %748 = vmatprep.subr.mxu0 0.0
  %749 = vmatpush1.msra.mxu0 0.0
  %750 = vmatprep.subr.mxu0 0.0
  %751 = vmatpush1.msra.mxu0 0.0
  %752 = vmatprep.subr.mxu0 0.0
  %753 = vmatpush1.msra.mxu0 0.0
  %754 = vmatprep.subr.mxu0 0.0
  %755 = vmatpush1.msra.mxu0 0.0
  %756 = vmatprep.subr.mxu0 0.0
  %757 = vmatpush1.msra.mxu0 0.0
  %758 = vmatprep.subr.mxu0 0.0
  %759 = vmatpush1.msra.mxu0 0.0
  %760 = vmatprep.subr.mxu0 0.0
  %761 = vmatpush1.msra.mxu0 0.0
  %762 = vmatprep.subr.mxu0 0.0
  %763 = vmatpush1.msra.mxu0 0.0
  %764 = vmatprep.subr.mxu0 0.0
  %765 = vmatpush1.msra.mxu0 0.0
  %766 = vmatprep.subr.mxu0 0.0
  %767 = vmatpush1.msra.mxu0 0.0
  %768 = vmatprep.subr.mxu0 0.0
  %769 = vmatpush1.msra.mxu0 0.0
  %770 = vmatprep.subr.mxu0 0.0
  %771 = vmatpush1.msra.mxu0 0.0
  %772 = vmatprep.subr.mxu0 0.0
  %773 = vmatpush1.msra.mxu0 0.0
  %774 = vmatprep.subr.mxu0 0.0
  %775 = vmatpush1.msra.mxu0 0.0
  %776 = vmatprep.subr.mxu0 0.0
  %777 = vmatpush1.msra.mxu0 0.0
  %778 = vmatprep.subr.mxu0 0.0
  %779 = vmatpush1.msra.mxu0 0.0
  %780 = vmatprep.subr.mxu0 0.0
  %781 = vmatpush1.msra.mxu0 0.0
  %782 = vmatprep.subr.mxu0 0.0
  %783 = vmatpush1.msra.mxu0 0.0
  %784 = vmatprep.subr.mxu0 0.0
  %785 = vmatpush1.msra.mxu0 0.0
  %786 = vmatprep.subr.mxu0 0.0
  %787 = vmatpush1.msra.mxu0 0.0
  %788 = vmatprep.mubr.f32.mxu0 0.0
  %789 = vmatmul.mubr.f32.gmra.mrb[0].mxu0 %v722
  %v790 = vpop.f32.mrb[0].mxu0
  %v791 = vadd.f32 %v720, %v790
  %v792 = vpop.f32.mrb[0].mxu0
  %793 = vdwg.mxu0
  %v794 = vmax.f32 %v791, 0.0
  %v795 = vld [vmem:[%s7] sm:$0xff]
  %v796 = vld [vmem:[%s7 + $0x8] sm:$0xff]
  %v797 = vld [vmem:[%s7 + $0x10] sm:$0xff]
  %v798 = vld [vmem:[%s7 + $0x18] sm:$0xff]
  %v799 = vld [vmem:[%s7 + $0x20] sm:$0xff]
  %v800 = vld [vmem:[%s7 + $0x28] sm:$0xff]
  %v801 = vld [vmem:[%s7 + $0x30] sm:$0xff]
  %v802 = vld [vmem:[%s7 + $0x38] sm:$0xff]
  %v803 = vld [vmem:[%s7 + $0x40] sm:$0xff]
  %v804 = vld [vmem:[%s7 + $0x48] sm:$0xff]
  %v805 = vld [vmem:[%s7 + $0x50] sm:$0xff]
  %v806 = vld [vmem:[%s7 + $0x58] sm:$0xff]
  %v807 = vld [vmem:[%s7 + $0x60] sm:$0xff]
  %v808 = vld [vmem:[%s7 + $0x68] sm:$0xff]
  %v809 = vld [vmem:[%s7 + $0x70] sm:$0xff]
  %v810 = vld [vmem:[%s7 + $0x78] sm:$0xff]
  %v811 = vld [vmem:[%s7 + $0x80] sm:$0xff]
  %v812 = vld [vmem:[%s7 + $0x88] sm:$0xff]
  %v813 = vld [vmem:[%s8 + $0x5] ss:$0 sm:$0xff]
  %v815 = vsel %vm402, %v794, 0
  %817 = vmatprep.subr.mxu0 0.0
  %818 = vmatpush1.msra.mxu0 %v795
  %819 = vmatprep.subr.mxu0 0.0
  %820 = vmatpush1.msra.mxu0 %v796
  %821 = vmatprep.subr.mxu0 0.0
  %822 = vmatpush1.msra.mxu0 %v797
  %823 = vmatprep.subr.mxu0 0.0
  %824 = vmatpush1.msra.mxu0 %v798
  %825 = vmatprep.subr.mxu0 0.0
  %826 = vmatpush1.msra.mxu0 %v799
  %827 = vmatprep.subr.mxu0 0.0
  %828 = vmatpush1.msra.mxu0 %v800
  %829 = vmatprep.subr.mxu0 0.0
  %830 = vmatpush1.msra.mxu0 %v801
  %831 = vmatprep.subr.mxu0 0.0
  %832 = vmatpush1.msra.mxu0 %v802
  %833 = vmatprep.subr.mxu0 0.0
  %834 = vmatpush1.msra.mxu0 %v803
  %835 = vmatprep.subr.mxu0 0.0
  %836 = vmatpush1.msra.mxu0 %v804
  %837 = vmatprep.subr.mxu0 0.0
  %838 = vmatpush1.msra.mxu0 %v805
  %839 = vmatprep.subr.mxu0 0.0
  %840 = vmatpush1.msra.mxu0 %v806
  %841 = vmatprep.subr.mxu0 0.0
  %842 = vmatpush1.msra.mxu0 %v807
  %843 = vmatprep.subr.mxu0 0.0
  %844 = vmatpush1.msra.mxu0 %v808
  %845 = vmatprep.subr.mxu0 0.0
  %846 = vmatpush1.msra.mxu0 %v809
  %847 = vmatprep.subr.mxu0 0.0
  %848 = vmatpush1.msra.mxu0 %v810
  %849 = vmatprep.subr.mxu0 0.0
  %850 = vmatpush1.msra.mxu0 %v811
  %851 = vmatprep.subr.mxu0 0.0
  %852 = vmatpush1.msra.mxu0 %v812
  %853 = vmatprep.subr.mxu0 0.0
  %854 = vmatpush1.msra.mxu0 0.0
  %855 = vmatprep.subr.mxu0 0.0
  %856 = vmatpush1.msra.mxu0 0.0
  %857 = vmatprep.subr.mxu0 0.0
  %858 = vmatpush1.msra.mxu0 0.0
  %859 = vmatprep.subr.mxu0 0.0
  %860 = vmatpush1.msra.mxu0 0.0
  %861 = vmatprep.subr.mxu0 0.0
  %862 = vmatpush1.msra.mxu0 0.0
  %863 = vmatprep.subr.mxu0 0.0
  %864 = vmatpush1.msra.mxu0 0.0
  %865 = vmatprep.subr.mxu0 0.0
  %866 = vmatpush1.msra.mxu0 0.0
  %867 = vmatprep.subr.mxu0 0.0
  %868 = vmatpush1.msra.mxu0 0.0
  %869 = vmatprep.subr.mxu0 0.0
  %870 = vmatpush1.msra.mxu0 0.0
  %871 = vmatprep.subr.mxu0 0.0
  %872 = vmatpush1.msra.mxu0 0.0
  %873 = vmatprep.subr.mxu0 0.0
  %874 = vmatpush1.msra.mxu0 0.0
  %875 = vmatprep.subr.mxu0 0.0
  %876 = vmatpush1.msra.mxu0 0.0
  %877 = vmatprep.subr.mxu0 0.0
  %878 = vmatpush1.msra.mxu0 0.0
  %879 = vmatprep.subr.mxu0 0.0
  %880 = vmatpush1.msra.mxu0 0.0
  %881 = vmatprep.mubr.f32.mxu0 %v815
  %882 = vmatmul.mubr.f32.gmra.mrb[0].mxu0 %v634
  %v883 = vpop.f32.mrb[0].mxu0
  %v884 = vadd.f32 %v813, %v883
  %v885 = vpop.f32.mrb[0].mxu0
  %886 = vdwg.mxu0
  %vm887 = vcmask 41984
  %888 = vst.msk [vmem:[%s9] sm:$0x3] %vm887, %v884
  // Predicated region
  $region38: #{place_maze_net_forward.1} parent=0 // pred_check
    _
  $region39: #{place_maze_net_forward.1} parent=0 // pred_check_branch
    %890 = sbr.rel (0) target = $region41
  $region40: #{place_maze_net_forward.1} parent=0 // pred_region
    _
  $region41: #{place_maze_net_forward.1} parent=0 // pred_fallthru
    _
  // Predicated region
  $region42: #{place_maze_net_forward.1} parent=0 // pred_check
    _
  $region43: #{place_maze_net_forward.1} parent=0 // pred_check_branch
    %892 = sbr.rel (0) target = $region45
  $region44: #{place_maze_net_forward.1} parent=0 // pred_region
    _
  $region45: #{place_maze_net_forward.1} parent=0 // pred_fallthru
    _

</llo_original>
